<compile_context>
chip_gen: v5e
topology: v5e:2x2
jax: 0.10.0
libtpu: 0.0.40
codegen_flags: <defaults>
</compile_context>

<pallas_src>
import functools

import jax
import jax.numpy as jnp
from jax.experimental import pallas as pl
from jax.experimental.pallas import tpu as pltpu

_LANE = 128
_SUBLANE = 8


def _dice_sums_kernel(S_total, TS, apply_mask,
                      logits_ref, targets_ref, inter_ref, union_ref,
                      inter_acc, union_acc):
    """Grid = (row_tiles, spatial_tiles); spatial axis is the reduction axis."""
    k = pl.program_id(1)

    @pl.when(k == 0)
    def _():
        inter_acc[...] = jnp.zeros_like(inter_acc)
        union_acc[...] = jnp.zeros_like(union_acc)

    x = logits_ref[...].astype(jnp.float32)
    t = targets_ref[...].astype(jnp.float32)
    probs = 1.0 / (1.0 + jnp.exp(-x))          # sigmoid (EUP exp + reciprocal)

    pt = probs * t                              # intersection contribution
    u = probs + t                               # fused union contribution

    if apply_mask:
        # Ragged last spatial tile: zero out columns beyond the true extent.
        col = k * TS + jax.lax.broadcasted_iota(jnp.int32, x.shape, 1)
        valid = col < S_total
        pt = jnp.where(valid, pt, 0.0)
        u = jnp.where(valid, u, 0.0)

    inter_acc[...] += jnp.sum(pt, axis=-1, keepdims=True)
    union_acc[...] += jnp.sum(u, axis=-1, keepdims=True)

    @pl.when(k == pl.num_programs(1) - 1)
    def _():
        inter_ref[...] = inter_acc[...]
        union_ref[...] = union_acc[...]


def _choose_tiles(N, S, bytes_x, bytes_t, budget_bytes=4 * 1024 * 1024):
    """Pick (row_tile, spatial_tile) from a VMEM budget.

    budget_bytes ~= combined bytes of both input blocks per grid step; with
    double buffering the pipeline footprint is ~2x that, which stays under the
    default scoped VMEM on v5e (16 MiB), v6e and v7x (32 MiB).
    """
    # Row tile: multiple of 8 when possible (enables the parallel row axis on
    # multi-TensorCore chips); otherwise take all rows (block == full dim).
    if N % _SUBLANE == 0:
        TN = min(N, 64)
    else:
        TN = N

    per_col = max(1, TN * (bytes_x + bytes_t))
    ts = max(_LANE, (budget_bytes // per_col) // _LANE * _LANE)

    if S % _LANE == 0:
        TS = min(ts, S)
    elif S > _LANE:
        TS = min(ts, (S // _LANE) * _LANE)   # ragged last tile handled by mask
    else:
        TS = S                               # tiny spatial dim: one full block
    return TN, TS


def dice_loss(logits, targets, smooth=1e-5):
    """Soft Dice loss, matching the PyTorch DiceLoss.forward semantics."""
    B, C, H, W = logits.shape
    N, S = B * C, H * W

    x = logits.reshape(N, S)
    t = targets.reshape(N, S)
    if t.dtype == jnp.bool_:                 # avoid i1 loads inside the kernel
        t = t.astype(jnp.float32)

    TN, TS = _choose_tiles(N, S,
                           jnp.dtype(x.dtype).itemsize,
                           jnp.dtype(t.dtype).itemsize)
    grid = (pl.cdiv(N, TN), pl.cdiv(S, TS))
    apply_mask = (S % TS) != 0

    kernel = functools.partial(_dice_sums_kernel, S, TS, apply_mask)

    inter, union = pl.pallas_call(
        kernel,
        out_shape=(jax.ShapeDtypeStruct((N, 1), jnp.float32),
                   jax.ShapeDtypeStruct((N, 1), jnp.float32)),
        grid_spec=pltpu.PrefetchScalarGridSpec(
            num_scalar_prefetch=0,
            grid=grid,
            in_specs=[
                pl.BlockSpec((TN, TS), lambda i, k: (i, k)),
                pl.BlockSpec((TN, TS), lambda i, k: (i, k)),
            ],
            out_specs=[
                pl.BlockSpec((TN, 1), lambda i, k: (i, 0)),
                pl.BlockSpec((TN, 1), lambda i, k: (i, 0)),
            ],
            scratch_shapes=[
                pltpu.VMEM((TN, 1), jnp.float32),
                pltpu.VMEM((TN, 1), jnp.float32),
            ],
        ),
        compiler_params=pltpu.CompilerParams(
            dimension_semantics=("parallel", "arbitrary")),
    )(x, t)

    inter = inter[:, 0]
    union = union[:, 0]
    dice = (2.0 * inter + smooth) / (union + smooth)
    return 1.0 - jnp.mean(dice)


def _dice_loss_ref(logits, targets, smooth=1e-5):
    probs = jax.nn.sigmoid(logits.astype(jnp.float32))
    B, C = probs.shape[0], probs.shape[1]
    p = probs.reshape(B, C, -1)
    t = targets.astype(jnp.float32).reshape(B, C, -1)
    inter = jnp.sum(p * t, axis=2)
    union = jnp.sum(p, axis=2) + jnp.sum(t, axis=2)
    dice = (2.0 * inter + smooth) / (union + smooth)
    return 1.0 - jnp.mean(dice)


if __name__ == "__main__":
    key = jax.random.PRNGKey(0)
    k1, k2, k3, k4 = jax.random.split(key, 4)

    # Case 1: module-consistent small shapes (128-aligned spatial extent).
    B, C, H, W = 2, 4, 16, 16
    logits = jax.random.normal(k1, (B, C, H, W), dtype=jnp.float32)
    targets = (jax.random.uniform(k2, (B, C, H, W)) > 0.5).astype(jnp.float32)

    loss = jax.block_until_ready(dice_loss(logits, targets))
    ref = jax.block_until_ready(_dice_loss_ref(logits, targets))
    assert jnp.allclose(loss, ref, atol=1e-5, rtol=1e-5), (loss, ref)

    # Case 2: non-128-aligned spatial size and non-multiple-of-8 row count;
    # exercises the masked ragged spatial tile and multi-step accumulation.
    B2, C2, H2, W2 = 2, 3, 20, 20
    logits2 = jax.random.normal(k3, (B2, C2, H2, W2), dtype=jnp.float32)
    targets2 = (jax.random.uniform(k4, (B2, C2, H2, W2)) > 0.5).astype(jnp.float32)

    loss2 = jax.block_until_ready(dice_loss(logits2, targets2))
    ref2 = jax.block_until_ready(_dice_loss_ref(logits2, targets2))
    assert jnp.allclose(loss2, ref2, atol=1e-5, rtol=1e-5), (loss2, ref2)

    print("KERNEL_OK")
</pallas_src>

<mosaic_0001>
module attributes {stable_mosaic.version = 11 : i64} {
  func.func @_dice_sums_kernel(%arg0: i32, %arg1: i32, %arg2: memref<8x256xf32, #tpu.memory_space<vmem>>, %arg3: memref<8x256xf32, #tpu.memory_space<vmem>>, %arg4: memref<8x1xf32, #tpu.memory_space<vmem>>, %arg5: memref<8x1xf32, #tpu.memory_space<vmem>>, %arg6: memref<8x1xf32, #tpu.memory_space<vmem>>, %arg7: memref<8x1xf32, #tpu.memory_space<vmem>>) attributes {dimension_semantics = [#tpu.dimension_semantics<parallel>, #tpu.dimension_semantics<arbitrary>], iteration_bounds = array<i64: 1, 1>, scalar_prefetch = 0 : i64, scratch_operands = 2 : i64, tpu.core_type = #tpu.core_type<tc>, window_params = [{transform_indices = @transform_0, window_bounds = array<i64: 8, 256>}, {transform_indices = @transform_1, window_bounds = array<i64: 8, 256>}, {transform_indices = @transform_2, window_bounds = array<i64: 8, 1>}, {transform_indices = @transform_3, window_bounds = array<i64: 8, 1>}]} {
    %c0_i32 = arith.constant 0 : i32
    %0 = arith.cmpi eq, %arg1, %c0_i32 : i32
    %1 = arith.extui %0 : i1 to i32
    %c0_i32_0 = arith.constant 0 : i32
    %2 = arith.cmpi ne, %1, %c0_i32_0 : i32
    scf.if %2 {
      %cst_18 = arith.constant 0.000000e+00 : f32
      %27 = vector.broadcast %cst_18 : f32 to vector<8x1xf32>
      %c0_19 = arith.constant 0 : index
      %c0_20 = arith.constant 0 : index
      %28 = vector.load %arg6[%c0_19, %c0_20] : memref<8x1xf32, #tpu.memory_space<vmem>>, vector<8x1xf32>
      tpu.vector_store %arg6[%c0_19, %c0_20], %27 {strides = array<i32>} : memref<8x1xf32, #tpu.memory_space<vmem>>, vector<8x1xf32>,
      %cst_21 = arith.constant 0.000000e+00 : f32
      %29 = vector.broadcast %cst_21 : f32 to vector<8x1xf32>
      %c0_22 = arith.constant 0 : index
      %c0_23 = arith.constant 0 : index
      %30 = vector.load %arg7[%c0_22, %c0_23] : memref<8x1xf32, #tpu.memory_space<vmem>>, vector<8x1xf32>
      tpu.vector_store %arg7[%c0_22, %c0_23], %29 {strides = array<i32>} : memref<8x1xf32, #tpu.memory_space<vmem>>, vector<8x1xf32>,
    } else {
    }
    %c0 = arith.constant 0 : index
    %c0_1 = arith.constant 0 : index
    %3 = vector.load %arg2[%c0, %c0_1] : memref<8x256xf32, #tpu.memory_space<vmem>>, vector<8x256xf32>
    %c0_2 = arith.constant 0 : index
    %c0_3 = arith.constant 0 : index
    %4 = vector.load %arg3[%c0_2, %c0_3] : memref<8x256xf32, #tpu.memory_space<vmem>>, vector<8x256xf32>
    %cst = arith.constant 0.000000e+00 : f32
    %5 = vector.broadcast %cst : f32 to vector<8x256xf32>
    %6 = arith.subf %5, %3 : vector<8x256xf32>
    %7 = math.exp %6 : vector<8x256xf32>
    %cst_4 = arith.constant 1.000000e+00 : f32
    %8 = vector.broadcast %cst_4 : f32 to vector<8x256xf32>
    %9 = arith.addf %8, %7 : vector<8x256xf32>
    %cst_5 = arith.constant 1.000000e+00 : f32
    %10 = vector.broadcast %cst_5 : f32 to vector<8x256xf32>
    %11 = arith.divf %10, %9 : vector<8x256xf32>
    %12 = arith.mulf %11, %4 : vector<8x256xf32>
    %13 = arith.addf %11, %4 : vector<8x256xf32>
    %c0_6 = arith.constant 0 : index
    %c0_7 = arith.constant 0 : index
    %14 = vector.load %arg6[%c0_6, %c0_7] : memref<8x1xf32, #tpu.memory_space<vmem>>, vector<8x1xf32>
    %cst_8 = arith.constant dense<0.000000e+00> : vector<8xf32>
    %15 = vector.multi_reduction <add>, %12, %cst_8 [1] : vector<8x256xf32> to vector<8xf32>
    %16 = vector.shape_cast %15 : vector<8xf32> to vector<8x1xf32>
    %17 = arith.addf %14, %16 : vector<8x1xf32>
    %c0_9 = arith.constant 0 : index
    %c0_10 = arith.constant 0 : index
    %18 = vector.load %arg6[%c0_9, %c0_10] : memref<8x1xf32, #tpu.memory_space<vmem>>, vector<8x1xf32>
    tpu.vector_store %arg6[%c0_9, %c0_10], %17 {strides = array<i32>} : memref<8x1xf32, #tpu.memory_space<vmem>>, vector<8x1xf32>,
    %c0_11 = arith.constant 0 : index
    %c0_12 = arith.constant 0 : index
    %19 = vector.load %arg7[%c0_11, %c0_12] : memref<8x1xf32, #tpu.memory_space<vmem>>, vector<8x1xf32>
    %cst_13 = arith.constant dense<0.000000e+00> : vector<8xf32>
    %20 = vector.multi_reduction <add>, %13, %cst_13 [1] : vector<8x256xf32> to vector<8xf32>
    %21 = vector.shape_cast %20 : vector<8xf32> to vector<8x1xf32>
    %22 = arith.addf %19, %21 : vector<8x1xf32>
    %c0_14 = arith.constant 0 : index
    %c0_15 = arith.constant 0 : index
    %23 = vector.load %arg7[%c0_14, %c0_15] : memref<8x1xf32, #tpu.memory_space<vmem>>, vector<8x1xf32>
    tpu.vector_store %arg7[%c0_14, %c0_15], %22 {strides = array<i32>} : memref<8x1xf32, #tpu.memory_space<vmem>>, vector<8x1xf32>,
    %c0_i32_16 = arith.constant 0 : i32
    %24 = arith.cmpi eq, %arg1, %c0_i32_16 : i32
    %25 = arith.extui %24 : i1 to i32
    %c0_i32_17 = arith.constant 0 : i32
    %26 = arith.cmpi ne, %25, %c0_i32_17 : i32
    scf.if %26 {
      %c0_18 = arith.constant 0 : index
      %c0_19 = arith.constant 0 : index
      %27 = vector.load %arg6[%c0_18, %c0_19] : memref<8x1xf32, #tpu.memory_space<vmem>>, vector<8x1xf32>
      %c0_20 = arith.constant 0 : index
      %c0_21 = arith.constant 0 : index
      %28 = vector.load %arg4[%c0_20, %c0_21] : memref<8x1xf32, #tpu.memory_space<vmem>>, vector<8x1xf32>
      tpu.vector_store %arg4[%c0_20, %c0_21], %27 {strides = array<i32>} : memref<8x1xf32, #tpu.memory_space<vmem>>, vector<8x1xf32>,
      %c0_22 = arith.constant 0 : index
      %c0_23 = arith.constant 0 : index
      %29 = vector.load %arg7[%c0_22, %c0_23] : memref<8x1xf32, #tpu.memory_space<vmem>>, vector<8x1xf32>
      %c0_24 = arith.constant 0 : index
      %c0_25 = arith.constant 0 : index
      %30 = vector.load %arg5[%c0_24, %c0_25] : memref<8x1xf32, #tpu.memory_space<vmem>>, vector<8x1xf32>
      tpu.vector_store %arg5[%c0_24, %c0_25], %29 {strides = array<i32>} : memref<8x1xf32, #tpu.memory_space<vmem>>, vector<8x1xf32>,
    } else {
    }
    return
  }
  func.func @transform_0(%arg0: i32, %arg1: i32) -> (i32, i32) {
    %c0_i32 = arith.constant 0 : i32
    return %arg0, %arg1 : i32, i32
  }
  func.func @transform_1(%arg0: i32, %arg1: i32) -> (i32, i32) {
    %c0_i32 = arith.constant 0 : i32
    return %arg0, %arg1 : i32, i32
  }
  func.func @transform_2(%arg0: i32, %arg1: i32) -> (i32, i32) {
    %c0_i32 = arith.constant 0 : i32
    %c0_i32_0 = arith.constant 0 : i32
    return %arg0, %c0_i32 : i32, i32
  }
  func.func @transform_3(%arg0: i32, %arg1: i32) -> (i32, i32) {
    %c0_i32 = arith.constant 0 : i32
    %c0_i32_0 = arith.constant 0 : i32
    return %arg0, %c0_i32 : i32, i32
  }
}

</mosaic_0001>

<llo_original>
// kernel: tpu_custom_call.1
$region0: #{tpu_custom_call.1}
  #allocation0 [shape = 'u32[]', space=smem, size = 0x4, offset = 0x4, fixed_abs, tag = 'smem constant byte address 0x4 - core index']
  #allocation1 [shape = 'u32[72,128]{1,0:T(1,128)}', space=vmem, size = 0x9000, scoped, tag = 'internal scratch']
  #allocation2 [shape = 'f32[8,1]{1,0:T(8,128)}', space=vmem, size = 0x1000, scoped, tag = 'scratch operand']
  #allocation3 [shape = 'f32[8,1]{1,0:T(8,128)}', space=vmem, size = 0x1000, scoped, tag = 'scratch operand']
  %s0 = inlined_call_operand.hbm [shape: f32[8,256], index: 0, kind: input, shape index: {}]
  %s1 = inlined_call_operand.hbm [shape: f32[8,256], index: 1, kind: input, shape index: {}]
  %s2 = inlined_call_operand.vmem [shape: f32[8,1], index: 2, kind: output, shape index: {0}]
  %s3 = inlined_call_operand.vmem [shape: f32[8,1], index: 3, kind: output, shape index: {1}]
  %4 = xla_tuple %s2, %s3
  %s5 = sld [smem:[#allocation0]]
  $region42: #{tpu_custom_call.1} parent=0
    _
  %s7 = ssub.s32 1, %s5
  %s8 = scalar_select 0, %s7, %s5
  $region1: #{tpu_custom_call.1} parent=0
    #allocation4 [shape = 'u8[8192]{0}', space=vmem, size = 0x2000, scoped, tag = 'input window, operand 0, single buffered']
    #allocation5 [shape = 's32[1]{0}', space=sflag, size = 0x4, scoped, tag = 'scoped memory for tpu_custom_call.1']
    #allocation6 [shape = 'u8[8192]{0}', space=vmem, size = 0x2000, scoped, tag = 'input window, operand 1, single buffered']
    #allocation7 [shape = 's32[1]{0}', space=sflag, size = 0x4, scoped, tag = 'scoped memory for tpu_custom_call.1']
    %9 = vsyncpa [#allocation5], 0
    %10 = vsyncpa [#allocation7], 0
    // Predicated region
    $region2: #{tpu_custom_call.1} parent=1 // pred_check
      _
    $region3: #{tpu_custom_call.1} parent=1 // pred_check_branch
      %12 = sbr.rel (0) target = $region5
    $region4: #{tpu_custom_call.1} parent=1 // pred_region
      %14 = vsyncadd [#allocation5], 0
      %s16 = sshll.u32 %s0, 4
      %s17 = int_to_ptr.hbm [resolvable:$true] %s16
      %s18 = sshll.u32 [#allocation4], 4
      %s19 = int_to_ptr.vmem [resolvable:$true] %s18
      %21 = dma.hbm_to_vmem [thread:$0]  %s17, 256, %s19, [#allocation5]
    $region5: #{tpu_custom_call.1} parent=1 // pred_fallthru
      _
    // Predicated region
    $region6: #{tpu_custom_call.1} parent=1 // pred_check
      _
    $region7: #{tpu_custom_call.1} parent=1 // pred_check_branch
      %23 = sbr.rel (0) target = $region9
    $region8: #{tpu_custom_call.1} parent=1 // pred_region
      %25 = vsyncadd [#allocation7], 0
      %s27 = sshll.u32 %s1, 4
      %s28 = int_to_ptr.hbm [resolvable:$true] %s27
      %s29 = sshll.u32 [#allocation6], 4
      %s30 = int_to_ptr.vmem [resolvable:$true] %s29
      %32 = dma.hbm_to_vmem [thread:$0]  %s28, 256, %s30, [#allocation7]
    $region9: #{tpu_custom_call.1} parent=1 // pred_fallthru
      _
    // Predicated region
    $region10: #{tpu_custom_call.1} parent=1 // pred_check
      _
    $region11: #{tpu_custom_call.1} parent=1 // pred_check_branch
      %34 = sbr.rel (0) target = $region13
    $region12: #{tpu_custom_call.1} parent=1 // pred_region
      %36 = dma.done [#allocation5], 256
    $region13: #{tpu_custom_call.1} parent=1 // pred_fallthru
      _
    // Predicated region
    $region14: #{tpu_custom_call.1} parent=1 // pred_check
      _
    $region15: #{tpu_custom_call.1} parent=1 // pred_check_branch
      %38 = sbr.rel (0) target = $region17
    $region16: #{tpu_custom_call.1} parent=1 // pred_region
      %40 = dma.done [#allocation7], 256
    $region17: #{tpu_custom_call.1} parent=1 // pred_fallthru
      _
    %p41 = scmp.eq.s32.totalorder 0, 0
    // Predicated region
    $region18: #{tpu_custom_call.1} parent=1 // pred_check
      %p42 = pneg %p41
    $region19: #{tpu_custom_call.1} parent=1 // pred_check_branch
      %44 = sbr.rel (%p42) target = $region21
    $region20: #{tpu_custom_call.1} parent=1 // pred_region
      %vm45 = vcmask 7168
      %46 = vst.msk [vmem:[#allocation2] sm:$0xff] %vm45, 0.0
      %47 = vst.msk [vmem:[#allocation3] sm:$0xff] %vm45, 0.0
    $region21: #{tpu_custom_call.1} parent=1 // pred_fallthru
      _
    %v48 = vld [vmem:[#allocation4] sm:$0xff]
    %v49 = vld [vmem:[#allocation4 + $0x8] sm:$0xff]
    %v50 = vld [vmem:[#allocation6] sm:$0xff]
    %v51 = vld [vmem:[#allocation6 + $0x8] sm:$0xff]
    %v52 = vsub.f32 0.0, %v48
    %v53 = vsub.f32 0.0, %v49
    %v54 = vmul.f32 %v52, 1.442695
    %v55 = vpow.pop %v54
    %v56 = vmul.f32 %v53, 1.442695
    %v57 = vpow.pop %v56
    %v58 = vadd.f32 %v55, 1.0
    %v59 = vadd.f32 %v57, 1.0
    %v60 = vrcp.pop %v58
    %v61 = vmul.f32 %v58, %v60
    %v62 = vsub.f32 1.0, %v61
    %v63 = vmul.f32 %v60, %v62
    %v64 = vadd.f32 %v60, %v63
    %vm65 = vweird.f32 %v58
    %vm66 = vweird.f32 %v60
    %vm67 = vmor %vm65, %vm66
    %v68 = vsel %vm67, %v60, %v64
    %v69 = vand.u32 2147483647, %v58
    %vm70 = vcmp.eq.f32.partialorder %v69, 8.507059e+37
    %v71 = vand.u32 %v58, 2147483648
    %v72 = vor.u32 1.1754944e-38, %v71
    %v73 = vsel %vm70, %v72, %v68
    %v74 = vmul.f32 1.0, %v73
    %v75 = vrcp.pop %v59
    %v76 = vmul.f32 %v59, %v75
    %v77 = vsub.f32 1.0, %v76
    %v78 = vmul.f32 %v75, %v77
    %v79 = vadd.f32 %v75, %v78
    %vm80 = vweird.f32 %v59
    %vm81 = vweird.f32 %v75
    %vm82 = vmor %vm80, %vm81
    %v83 = vsel %vm82, %v75, %v79
    %v84 = vand.u32 2147483647, %v59
    %vm85 = vcmp.eq.f32.partialorder %v84, 8.507059e+37
    %v86 = vand.u32 %v59, 2147483648
    %v87 = vor.u32 1.1754944e-38, %v86
    %v88 = vsel %vm85, %v87, %v83
    %v89 = vmul.f32 1.0, %v88
    %v90 = vmul.f32 %v74, %v50
    %v91 = vmul.f32 %v89, %v51
    %v92 = vadd.f32 %v74, %v50
    %v93 = vadd.f32 %v89, %v51
    %v94 = vld [vmem:[#allocation2] sm:$0xff]
    %v95 = vadd.f32 %v90, %v91
    %96 = vadd.xlane.f32.xlu0 %v95
    %v97 = vpop.xlane.xlu0 %96
    %v98 = vadd.f32 %v94, %v97
    %vm99 = vcmask 7168
    %100 = vst.msk [vmem:[#allocation2] sm:$0xff] %vm99, %v98
    %v101 = vld [vmem:[#allocation3] sm:$0xff]
    %v102 = vadd.f32 %v92, %v93
    %103 = vadd.xlane.f32.xlu0 %v102
    %v104 = vpop.xlane.xlu0 %103
    %v105 = vadd.f32 %v101, %v104
    %106 = vst.msk [vmem:[#allocation3] sm:$0xff] %vm99, %v105
    // Predicated region
    $region22: #{tpu_custom_call.1} parent=1 // pred_check
      %p107 = pneg %p41
    $region23: #{tpu_custom_call.1} parent=1 // pred_check_branch
      %109 = sbr.rel (%p107) target = $region25
    $region24: #{tpu_custom_call.1} parent=1 // pred_region
      %v110 = vld [vmem:[#allocation2] sm:$0xff]
      %111 = vst.msk [vmem:[%s2] sm:$0xff] %vm99, %v110
      %v112 = vld [vmem:[#allocation3] sm:$0xff]
      %113 = vst.msk [vmem:[%s3] sm:$0xff] %vm99, %v112
    $region25: #{tpu_custom_call.1} parent=1 // pred_fallthru
      _
    // Predicated region
    $region26: #{tpu_custom_call.1} parent=1 // pred_check
      _
    $region27: #{tpu_custom_call.1} parent=1 // pred_check_branch
      %115 = sbr.rel (0) target = $region29
    $region28: #{tpu_custom_call.1} parent=1 // pred_region
      _
    $region29: #{tpu_custom_call.1} parent=1 // pred_fallthru
      _
    // Predicated region
    $region30: #{tpu_custom_call.1} parent=1 // pred_check
      _
    $region31: #{tpu_custom_call.1} parent=1 // pred_check_branch
      %117 = sbr.rel (0) target = $region33
    $region32: #{tpu_custom_call.1} parent=1 // pred_region
      _
    $region33: #{tpu_custom_call.1} parent=1 // pred_fallthru
      _
    // Predicated region
    $region34: #{tpu_custom_call.1} parent=1 // pred_check
      _
    $region35: #{tpu_custom_call.1} parent=1 // pred_check_branch
      %119 = sbr.rel (0) target = $region37
    $region36: #{tpu_custom_call.1} parent=1 // pred_region
      _
    $region37: #{tpu_custom_call.1} parent=1 // pred_fallthru
      _
    // Predicated region
    $region38: #{tpu_custom_call.1} parent=1 // pred_check
      _
    $region39: #{tpu_custom_call.1} parent=1 // pred_check_branch
      %121 = sbr.rel (0) target = $region41
    $region40: #{tpu_custom_call.1} parent=1 // pred_region
      _
    $region41: #{tpu_custom_call.1} parent=1 // pred_fallthru
      _
    %122 = vsyncpa [#allocation5], 1
    %123 = vsyncpa [#allocation7], 1

</llo_original>
